<compile_context>
chip_gen: v7x
topology: tpu7x:2x2x1
jax: 0.10.0
libtpu: 0.0.40
codegen_flags: <defaults>
</compile_context>

<pallas_src>
import functools

import jax
import jax.numpy as jnp
from jax.experimental import pallas as pl
from jax.experimental.pallas import tpu as pltpu


def _linear_kernel(x_ref, w_ref, b_ref, o_ref):
    # (rows, d_inp) @ (d_inp, d_model) -> f32 accumulate, +bias, cast to out dtype.
    acc = jnp.dot(x_ref[...], w_ref[...], preferred_element_type=jnp.float32)
    o_ref[...] = (acc + b_ref[...]).astype(o_ref.dtype)


def _round_up(a, b):
    return pl.cdiv(a, b) * b


_VMEM_TILE_BUDGET = 24 * 1024 * 1024   # per-step tile budget (bytes)
_VMEM_LIMIT = 32 * 1024 * 1024         # scoped VMEM limit (safe on v5e/v6e/v7x)


def _pick_row_tile(n, dm_pad, out_itemsize, row_tile):
    """Largest multiple-of-8 row tile that fits the VMEM tile budget."""
    rt = min(row_tile, _round_up(n, 8))
    rt = max(8, _round_up(rt, 8) if rt % 8 else rt)
    while rt > 8:
        # x tile is lane-padded (rt, 4) -> effectively rt*128*4 B, double-buffered.
        need = (2 * rt * 512                        # x tile (lane-padded), x2 buffers
                + 2 * rt * dm_pad * out_itemsize    # output tile, double-buffered
                + 2 * 8 * dm_pad * 4                # resident weight (sublane-padded)
                + 2 * 8 * dm_pad * 4)               # resident bias
        if need <= _VMEM_TILE_BUDGET:
            break
        rt = max(8, (rt // 2) // 8 * 8)
    # Give the (parallel) grid a few steps so both v7x TensorCores get work.
    min_steps = 4
    if n >= 8 * min_steps and pl.cdiv(n, rt) < min_steps:
        rt = max(8, _round_up(pl.cdiv(n, min_steps), 8))
    return rt


@functools.partial(jax.jit, static_argnames=("row_tile",))
def time_feature_embedding(x, weight, bias, *, row_tile=2048):
    """Pallas equivalent of TimeFeatureEmbedding.forward(x) = x @ W.T + b.

    x      : (..., d_inp) array (d_inp = 4 in the module), any float dtype
    weight : (d_model, d_inp)  -- PyTorch nn.Linear weight layout
    bias   : (d_model,)
    returns: (..., d_model) in x.dtype (matches PyTorch dtype behavior)
    """
    d_inp = x.shape[-1]
    d_model, d_inp_w = weight.shape
    assert d_inp == d_inp_w, "weight / input feature-dim mismatch"

    lead = x.shape[:-1]
    n = 1
    for s in lead:
        n *= s

    out_dtype = x.dtype
    out_itemsize = jnp.dtype(out_dtype).itemsize

    # Lane-dense output: pad d_model to a multiple of 128 only when required.
    dm_pad = _round_up(d_model, 128)
    w_t = weight.T.astype(x.dtype)                       # (d_inp, d_model), tiny
    b2 = bias.reshape(1, d_model).astype(jnp.float32)    # f32 add onto f32 acc
    if dm_pad != d_model:
        # TODO(synk): ideally keep the padded d_model through the model to avoid
        # the trailing column slice (extra HBM copy) below.
        w_t = jnp.pad(w_t, ((0, 0), (0, dm_pad - d_model)))
        b2 = jnp.pad(b2, ((0, 0), (0, dm_pad - d_model)))

    x2 = x.reshape(n, d_inp)                              # no dtype cast, no row pad

    rt = _pick_row_tile(n, dm_pad, out_itemsize, row_tile)
    grid = (pl.cdiv(n, rt),)                              # ragged last block masked by Pallas

    cost = pl.CostEstimate(
        flops=2 * n * d_inp * dm_pad,
        transcendentals=0,
        bytes_accessed=(n * d_inp * x2.dtype.itemsize
                        + d_inp * dm_pad * w_t.dtype.itemsize
                        + dm_pad * 4
                        + n * dm_pad * out_itemsize),
    )

    out = pl.pallas_call(
        _linear_kernel,
        out_shape=jax.ShapeDtypeStruct((n, dm_pad), out_dtype),
        grid=grid,
        in_specs=[
            pl.BlockSpec((rt, d_inp), lambda i: (i, 0)),       # row tile of x
            pl.BlockSpec((d_inp, dm_pad), lambda i: (0, 0)),   # weight, VMEM-resident
            pl.BlockSpec((1, dm_pad), lambda i: (0, 0)),       # bias, VMEM-resident
        ],
        out_specs=pl.BlockSpec((rt, dm_pad), lambda i: (i, 0)),
        compiler_params=pltpu.CompilerParams(
            dimension_semantics=("parallel",),                 # shard rows across TCs (v7x)
            vmem_limit_bytes=_VMEM_LIMIT,
        ),
        cost_estimate=cost,
    )(x2, w_t, b2)

    if dm_pad != d_model:
        out = out[:, :d_model]
    return out.reshape(*lead, d_model)


if __name__ == "__main__":
    # Small demo shapes consistent with the module: batch=2, seq=8, d_inp=4.
    # d_model=128 keeps the output lane-dense without any column padding.
    B, S, D_INP, D_MODEL = 2, 8, 4, 128
    key = jax.random.PRNGKey(0)
    kx, kw, kb = jax.random.split(key, 3)
    x = jax.random.normal(kx, (B, S, D_INP), dtype=jnp.float32)
    weight = jax.random.normal(kw, (D_MODEL, D_INP), dtype=jnp.float32) * 0.1
    bias = jax.random.normal(kb, (D_MODEL,), dtype=jnp.float32) * 0.1

    out = time_feature_embedding(x, weight, bias)
    out = jax.block_until_ready(out)

    ref = x @ weight.T + bias
    assert out.shape == (B, S, D_MODEL), out.shape
    assert out.dtype == x.dtype, out.dtype
    assert jnp.allclose(out, ref, atol=1e-4, rtol=1e-4), float(
        jnp.max(jnp.abs(out - ref)))
    print("KERNEL_OK")
</pallas_src>

<mosaic_0001>
module attributes {stable_mosaic.version = 11 : i64} {
  func.func @_linear_kernel(%arg0: i32, %arg1: memref<16x4xf32, #tpu.memory_space<vmem>>, %arg2: memref<4x128xf32, #tpu.memory_space<vmem>>, %arg3: memref<1x128xf32, #tpu.memory_space<vmem>>, %arg4: memref<16x128xf32, #tpu.memory_space<vmem>>) attributes {dimension_semantics = [#tpu.dimension_semantics<parallel>], iteration_bounds = array<i64: 1>, scalar_prefetch = 0 : i64, scratch_operands = 0 : i64, tpu.core_type = #tpu.core_type<tc>, window_params = [{transform_indices = @transform_0, window_bounds = array<i64: 16, 4>}, {pipeline_mode = #tpu.pipeline_mode<synchronous>, transform_indices = @transform_1, window_bounds = array<i64: 4, 128>}, {pipeline_mode = #tpu.pipeline_mode<synchronous>, transform_indices = @transform_2, window_bounds = array<i64: 1, 128>}, {transform_indices = @transform_3, window_bounds = array<i64: 16, 128>}]} {
    %c0 = arith.constant 0 : index
    %c0_0 = arith.constant 0 : index
    %0 = vector.load %arg1[%c0, %c0_0] : memref<16x4xf32, #tpu.memory_space<vmem>>, vector<16x4xf32>
    %c0_1 = arith.constant 0 : index
    %c0_2 = arith.constant 0 : index
    %1 = vector.load %arg2[%c0_1, %c0_2] : memref<4x128xf32, #tpu.memory_space<vmem>>, vector<4x128xf32>
    %cst = arith.constant dense<0.000000e+00> : vector<16x128xf32>
    %2 = tpu.matmul %0, %1, %cst {dimension_numbers = #tpu.dot_dimension_numbers<[1], [0], [0], [1], [0, 0, 1, 1], [], []>} : vector<16x4xf32>, vector<4x128xf32>, vector<16x128xf32> -> vector<16x128xf32>
    %c0_3 = arith.constant 0 : index
    %c0_4 = arith.constant 0 : index
    %3 = vector.load %arg3[%c0_3, %c0_4] : memref<1x128xf32, #tpu.memory_space<vmem>>, vector<1x128xf32>
    %4 = vector.broadcast %3 : vector<1x128xf32> to vector<16x128xf32>
    %5 = arith.addf %2, %4 : vector<16x128xf32>
    %c0_5 = arith.constant 0 : index
    %c0_6 = arith.constant 0 : index
    %6 = vector.load %arg4[%c0_5, %c0_6] : memref<16x128xf32, #tpu.memory_space<vmem>>, vector<16x128xf32>
    tpu.vector_store %arg4[%c0_5, %c0_6], %5 {strides = array<i32>} : memref<16x128xf32, #tpu.memory_space<vmem>>, vector<16x128xf32>,
    return
  }
  func.func @transform_0(%arg0: i32) -> (i32, i32) {
    %c0_i32 = arith.constant 0 : i32
    %c0_i32_0 = arith.constant 0 : i32
    return %arg0, %c0_i32 : i32, i32
  }
  func.func @transform_1(%arg0: i32) -> (i32, i32) {
    %c0_i32 = arith.constant 0 : i32
    %c0_i32_0 = arith.constant 0 : i32
    %c0_i32_1 = arith.constant 0 : i32
    return %c0_i32, %c0_i32_0 : i32, i32
  }
  func.func @transform_2(%arg0: i32) -> (i32, i32) {
    %c0_i32 = arith.constant 0 : i32
    %c0_i32_0 = arith.constant 0 : i32
    %c0_i32_1 = arith.constant 0 : i32
    return %c0_i32, %c0_i32_0 : i32, i32
  }
  func.func @transform_3(%arg0: i32) -> (i32, i32) {
    %c0_i32 = arith.constant 0 : i32
    %c0_i32_0 = arith.constant 0 : i32
    return %arg0, %c0_i32 : i32, i32
  }
}

</mosaic_0001>

<llo_original>
// kernel: time_feature_embedding.1
$region0: #{time_feature_embedding.1}
  #allocation0 [shape = 'u32[]', space=smem, size = 0x4, offset = 0x4, fixed_abs, tag = 'smem constant byte address 0x4 - core index']
  #allocation1 [shape = 'u32[144,128]{1,0:T(1,128)}', space=vmem, size = 0x12000, scoped, tag = 'internal scratch']
  %s0 = inlined_call_operand.vmem [shape: f32[16,4], index: 0, kind: input, shape index: {}]
  %s1 = inlined_call_operand.vmem [shape: f32[4,128], index: 1, kind: input, shape index: {}]
  %s2 = inlined_call_operand.vmem [shape: f32[1,128], index: 2, kind: input, shape index: {}]
  %s3 = inlined_call_operand.hbm [shape: f32[16,128], index: 3, kind: output, shape index: {}]
  %s4 = sld [smem:[#allocation0]]
  $region22: #{time_feature_embedding.1} parent=0
    _
  %s6 = ssub.s32 1, %s4
  %s7 = scalar_select 0, %s6, %s4
  $region1: #{time_feature_embedding.1} parent=0
    #allocation2 [shape = 'u8[8192]{0}', space=vmem, size = 0x2000, scoped, tag = 'output window, operand 0, single buffered']
    #allocation3 [shape = 's32[1]{0}', space=sflag, size = 0x4, scoped, tag = 'scoped memory for time_feature_embedding.1']
    %8 = vsyncpa [#allocation3], 0
    // Predicated region
    $region2: #{time_feature_embedding.1} parent=1 // pred_check
      _
    $region3: #{time_feature_embedding.1} parent=1 // pred_check_branch
      %10 = sbr.rel (0) target = $region5
    $region4: #{time_feature_embedding.1} parent=1 // pred_region
      _
    $region5: #{time_feature_embedding.1} parent=1 // pred_fallthru
      _
    // Predicated region
    $region6: #{time_feature_embedding.1} parent=1 // pred_check
      _
    $region7: #{time_feature_embedding.1} parent=1 // pred_check_branch
      %12 = sbr.rel (0) target = $region9
    $region8: #{time_feature_embedding.1} parent=1 // pred_region
      _
    $region9: #{time_feature_embedding.1} parent=1 // pred_fallthru
      _
    // Predicated region
    $region10: #{time_feature_embedding.1} parent=1 // pred_check
      _
    $region11: #{time_feature_embedding.1} parent=1 // pred_check_branch
      %14 = sbr.rel (0) target = $region13
    $region12: #{time_feature_embedding.1} parent=1 // pred_region
      _
    $region13: #{time_feature_embedding.1} parent=1 // pred_fallthru
      _
    %v15 = vld [vmem:[%s0] sm:$0xff]
    %v16 = vld [vmem:[%s0 + $0x8] sm:$0xff]
    %v17 = vld [vmem:[%s1] sm:$0xf]
    %v18 = vld [vmem:[%s2] sm:$0x1]
    %v20 = vlaneseq
    %v21 = vshrl.u32 %v20, 7
    %v22 = vsub.s32 0, %v21
    %v23 = vrot.slane %v18, %v22
    %vm25 = vcmask 31744
    %v27 = vsel %vm25, %v15, 0
    %v30 = vsel %vm25, %v16, 0
    %vm32 = vcmask 1043456
    %v34 = vsel %vm32, %v17, 0
    %36 = vmatprep.subr.mxu0 0.0
    %37 = vmatpush1.msra.mxu0 %v34
    %38 = vmatprep.subr.mxu0 0.0
    %39 = vmatpush1.msra.mxu0 0.0
    %40 = vmatprep.subr.mxu0 0.0
    %41 = vmatpush1.msra.mxu0 0.0
    %42 = vmatprep.subr.mxu0 0.0
    %43 = vmatpush1.msra.mxu0 0.0
    %44 = vmatprep.subr.mxu0 0.0
    %45 = vmatpush1.msra.mxu0 0.0
    %46 = vmatprep.subr.mxu0 0.0
    %47 = vmatpush1.msra.mxu0 0.0
    %48 = vmatprep.subr.mxu0 0.0
    %49 = vmatpush1.msra.mxu0 0.0
    %50 = vmatprep.subr.mxu0 0.0
    %51 = vmatpush1.msra.mxu0 0.0
    %52 = vmatprep.subr.mxu0 0.0
    %53 = vmatpush1.msra.mxu0 0.0
    %54 = vmatprep.subr.mxu0 0.0
    %55 = vmatpush1.msra.mxu0 0.0
    %56 = vmatprep.subr.mxu0 0.0
    %57 = vmatpush1.msra.mxu0 0.0
    %58 = vmatprep.subr.mxu0 0.0
    %59 = vmatpush1.msra.mxu0 0.0
    %60 = vmatprep.subr.mxu0 0.0
    %61 = vmatpush1.msra.mxu0 0.0
    %62 = vmatprep.subr.mxu0 0.0
    %63 = vmatpush1.msra.mxu0 0.0
    %64 = vmatprep.subr.mxu0 0.0
    %65 = vmatpush1.msra.mxu0 0.0
    %66 = vmatprep.subr.mxu0 0.0
    %67 = vmatpush1.msra.mxu0 0.0
    %68 = vmatprep.subr.mxu0 0.0
    %69 = vmatpush1.msra.mxu0 0.0
    %70 = vmatprep.subr.mxu0 0.0
    %71 = vmatpush1.msra.mxu0 0.0
    %72 = vmatprep.subr.mxu0 0.0
    %73 = vmatpush1.msra.mxu0 0.0
    %74 = vmatprep.subr.mxu0 0.0
    %75 = vmatpush1.msra.mxu0 0.0
    %76 = vmatprep.subr.mxu0 0.0
    %77 = vmatpush1.msra.mxu0 0.0
    %78 = vmatprep.subr.mxu0 0.0
    %79 = vmatpush1.msra.mxu0 0.0
    %80 = vmatprep.subr.mxu0 0.0
    %81 = vmatpush1.msra.mxu0 0.0
    %82 = vmatprep.subr.mxu0 0.0
    %83 = vmatpush1.msra.mxu0 0.0
    %84 = vmatprep.subr.mxu0 0.0
    %85 = vmatpush1.msra.mxu0 0.0
    %86 = vmatprep.subr.mxu0 0.0
    %87 = vmatpush1.msra.mxu0 0.0
    %88 = vmatprep.subr.mxu0 0.0
    %89 = vmatpush1.msra.mxu0 0.0
    %90 = vmatprep.subr.mxu0 0.0
    %91 = vmatpush1.msra.mxu0 0.0
    %92 = vmatprep.subr.mxu0 0.0
    %93 = vmatpush1.msra.mxu0 0.0
    %94 = vmatprep.subr.mxu0 0.0
    %95 = vmatpush1.msra.mxu0 0.0
    %96 = vmatprep.subr.mxu0 0.0
    %97 = vmatpush1.msra.mxu0 0.0
    %98 = vmatprep.subr.mxu0 0.0
    %99 = vmatpush1.msra.mxu0 0.0
    %100 = vmatprep.mubr.f32.mxu0 0.0
    %101 = vmatmul.mubr.f32.gmra.mrb[0].mxu0 %v27
    %v102 = vpop.f32.mrb[0].mxu0
    %v103 = vadd.f32 %v23, %v102
    %v104 = vpop.f32.mrb[0].mxu0
    %105 = vmatprep.mubr.f32.mxu0 0.0
    %106 = vmatmul.mubr.f32.gmra.mrb[0].mxu0 %v30
    %v107 = vpop.f32.mrb[0].mxu0
    %v108 = vadd.f32 %v23, %v107
    %v109 = vpop.f32.mrb[0].mxu0
    %110 = vdwg.mxu0
    %111 = vst [vmem:[#allocation2] sm:$0xff] %v103
    %112 = vst [vmem:[#allocation2 + $0x8] sm:$0xff] %v108
    // Predicated region
    $region14: #{time_feature_embedding.1} parent=1 // pred_check
      _
    $region15: #{time_feature_embedding.1} parent=1 // pred_check_branch
      %114 = sbr.rel (0) target = $region17
    $region16: #{time_feature_embedding.1} parent=1 // pred_region
      %s116 = ssub.s32 256, 256
      %117 = vsyncadd [#allocation3], %s116
      %s118 = sshll.u32 [#allocation2], 4
      %s119 = int_to_ptr.vmem [resolvable:$true] %s118
      %124 = dma.vmem_to_hbm [thread:$0]  %s119, 256, %s3, [#allocation3], 128, 128, 8
    $region17: #{time_feature_embedding.1} parent=1 // pred_fallthru
      _
    // Predicated region
    $region18: #{time_feature_embedding.1} parent=1 // pred_check
      _
    $region19: #{time_feature_embedding.1} parent=1 // pred_check_branch
      %126 = sbr.rel (0) target = $region21
    $region20: #{time_feature_embedding.1} parent=1 // pred_region
      %127 = dma.done [#allocation3], 256
    $region21: #{time_feature_embedding.1} parent=1 // pred_fallthru
      _
    %128 = vsyncpa [#allocation3], 1

</llo_original>
